<compile_context>
chip_gen: v6e
topology: v6e:2x2x1
jax: 0.10.0
libtpu: 0.0.40
codegen_flags: <defaults>
</compile_context>

<pallas_src>
import functools

import jax
import jax.numpy as jnp
from jax.experimental import pallas as pl
from jax.experimental.pallas import tpu as pltpu

EPS = 1e-5  # nn.LayerNorm default


def _sublayer_connection_kernel(
    seed_ref,      # SMEM scalar-prefetch: (1,) int32
    x_ref,         # (tm, H)  input rows
    gamma_ref,     # (1, H)   LayerNorm weight (f32)
    beta_ref,      # (1, H)   LayerNorm bias   (f32)
    w_ref,         # (H, H)   sublayer (Linear) weight (bf16 by default)
    b_ref,         # (1, H)   sublayer (Linear) bias   (f32)
    out_ref,       # (tm, H)  output rows
    *,
    dropout_p: float,
    keep_threshold: int,   # uint32 threshold = round(p * 2^32); drop if hash < threshold
    inv_keep: float,       # 1 / (1 - p), Python constant (not traced)
):
    x = x_ref[...].astype(jnp.float32)

    # ---- LayerNorm over last dim (biased variance, like torch.nn.LayerNorm) ----
    mean = jnp.mean(x, axis=-1, keepdims=True)
    centered = x - mean
    var = jnp.mean(centered * centered, axis=-1, keepdims=True)
    ln = centered * jax.lax.rsqrt(var + EPS)
    ln = ln * gamma_ref[...].astype(jnp.float32) + beta_ref[...].astype(jnp.float32)

    # ---- sublayer: Linear(H, H) on the MXU (bf16 inputs, f32 accumulate) ----
    y = jnp.dot(
        ln.astype(w_ref.dtype), w_ref[...], preferred_element_type=jnp.float32
    ) + b_ref[...].astype(jnp.float32)

    # ---- dropout (training semantics: drop with prob p, scale kept by 1/(1-p)) ----
    # Counter-based hash of the global element index -> mask is independent of
    # tile_m / grid shape, and needs no TPU-specific PRNG primitives.
    if dropout_p > 0.0:
        tm, h_dim = y.shape
        row = jax.lax.broadcasted_iota(jnp.int32, (tm, h_dim), 0).astype(jnp.uint32)
        col = jax.lax.broadcasted_iota(jnp.int32, (tm, h_dim), 1).astype(jnp.uint32)
        row_base = (pl.program_id(0) * tm).astype(jnp.uint32)
        idx = (row + row_base) * jnp.uint32(h_dim) + col
        h = (idx + jnp.uint32(0x9E3779B9)) ^ seed_ref[0].astype(jnp.uint32)
        # lowbias32 integer mix
        h = (h ^ (h >> jnp.uint32(16))) * jnp.uint32(0x7FEB352D)
        h = (h ^ (h >> jnp.uint32(15))) * jnp.uint32(0x846CA68B)
        h = h ^ (h >> jnp.uint32(16))
        keep = h >= jnp.uint32(keep_threshold)   # pure uint32 compare
        y = jnp.where(keep, y * jnp.float32(inv_keep), jnp.float32(0.0))

    # ---- residual add ----
    out_ref[...] = (x + y).astype(out_ref.dtype)


def _pick_tile_m(M: int, requested: int) -> int:
    """Largest sublane-aligned divisor of M <= requested; keep >=2 grid steps."""
    tm = min(requested, M)
    if M % tm != 0:
        candidates = [d for d in range(8, tm + 1, 8) if M % d == 0]
        tm = candidates[-1] if candidates else M
    # Keep at least 2 grid steps so the "parallel" row axis can shard across
    # v7x's two TensorCores (costs one ~0.35 us step on single-TC chips).
    if tm == M and M >= 16 and M % 2 == 0 and (M // 2) % 8 == 0:
        tm = M // 2
    return tm


def sublayer_connection(
    x, gamma, beta, w, b, *,
    dropout_p=0.1, seed=0, tile_m=512, matmul_dtype=jnp.bfloat16,
):
    """x: (B, S, H). Returns x + dropout(Linear(LayerNorm(x))), same dtype as x.

    For a memory-bound speedup, pass x in bf16 (LayerNorm stats, dropout and
    the residual are still computed in f32 inside the kernel).
    """
    B, S, H = x.shape
    M = B * S
    tile_m = _pick_tile_m(M, tile_m)
    assert M % tile_m == 0

    x2 = x.reshape(M, H)
    gamma2 = gamma.reshape(1, H).astype(jnp.float32)
    beta2 = beta.reshape(1, H).astype(jnp.float32)
    w2 = w.astype(matmul_dtype)            # bf16 MXU operands (f32 accumulation)
    b2 = b.reshape(1, H).astype(jnp.float32)
    seed_arr = jnp.array([seed], dtype=jnp.int32)

    keep_threshold = min(int(round(dropout_p * (1 << 32))), (1 << 32) - 1)
    inv_keep = 1.0 / (1.0 - dropout_p) if dropout_p < 1.0 else 0.0

    kernel = functools.partial(
        _sublayer_connection_kernel,
        dropout_p=float(dropout_p),
        keep_threshold=keep_threshold,
        inv_keep=inv_keep,
    )

    # VMEM estimate: double-buffered x/out tiles + double-buffered invariant
    # operands (W dominates once H grows).  Only override the scoped default
    # when we would otherwise exceed it.
    itemsize = jnp.dtype(x.dtype).itemsize
    est_vmem = (2 * tile_m * H * (itemsize + itemsize)
                + 2 * (H * H * jnp.dtype(matmul_dtype).itemsize + 3 * H * 4))
    compiler_kwargs = dict(dimension_semantics=("parallel",))
    if est_vmem > (32 << 20):
        compiler_kwargs["vmem_limit_bytes"] = min(int(est_vmem * 1.25), 128 << 20)

    out = pl.pallas_call(
        kernel,
        out_shape=jax.ShapeDtypeStruct((M, H), x.dtype),
        grid_spec=pltpu.PrefetchScalarGridSpec(
            num_scalar_prefetch=1,
            grid=(M // tile_m,),
            in_specs=[
                pl.BlockSpec((tile_m, H), lambda i, seed: (i, 0)),  # x rows
                pl.BlockSpec((1, H), lambda i, seed: (0, 0)),       # gamma
                pl.BlockSpec((1, H), lambda i, seed: (0, 0)),       # beta
                pl.BlockSpec((H, H), lambda i, seed: (0, 0)),       # W
                pl.BlockSpec((1, H), lambda i, seed: (0, 0)),       # bias
            ],
            out_specs=pl.BlockSpec((tile_m, H), lambda i, seed: (i, 0)),
        ),
        compiler_params=pltpu.CompilerParams(**compiler_kwargs),
    )(seed_arr, x2, gamma2, beta2, w2, b2)

    return out.reshape(B, S, H)


def _reference(x, gamma, beta, w, b, matmul_dtype=jnp.bfloat16):
    """Pure-JAX reference (dropout disabled), same bf16 matmul casts as the kernel."""
    xf = x.astype(jnp.float32)
    mean = jnp.mean(xf, axis=-1, keepdims=True)
    var = jnp.mean((xf - mean) ** 2, axis=-1, keepdims=True)
    ln = (xf - mean) * jax.lax.rsqrt(var + EPS) * gamma + beta
    y = jnp.dot(ln.astype(matmul_dtype), w.astype(matmul_dtype),
                preferred_element_type=jnp.float32) + b
    return (xf + y).astype(x.dtype)


if __name__ == "__main__":
    # Small but lane-aligned shapes: hidden = 128 (one lane width), 512 rows total.
    B, S, H = 4, 128, 128

    key = jax.random.PRNGKey(0)
    kx, kw = jax.random.split(key)

    x = jax.random.normal(kx, (B, S, H), dtype=jnp.float32)
    gamma = jnp.ones((H,), dtype=jnp.float32)
    beta = jnp.zeros((H,), dtype=jnp.float32)
    w = (jax.random.normal(kw, (H, H), dtype=jnp.float32) / jnp.sqrt(H)).astype(jnp.float32)
    b = jnp.zeros((H,), dtype=jnp.float32)

    # Correctness check against pure-JAX reference with dropout disabled.
    out_nodrop = sublayer_connection(x, gamma, beta, w, b, dropout_p=0.0, seed=0)
    jax.block_until_ready(out_nodrop)
    ref = _reference(x, gamma, beta, w, b)
    assert out_nodrop.shape == (B, S, H) and out_nodrop.dtype == jnp.float32
    assert bool(jnp.allclose(out_nodrop, ref, rtol=2e-2, atol=2e-2))

    # Training-mode run with dropout.
    out = sublayer_connection(x, gamma, beta, w, b, dropout_p=0.1, seed=1234)
    jax.block_until_ready(out)
    assert out.shape == (B, S, H) and out.dtype == jnp.float32
    assert bool(jnp.all(jnp.isfinite(out)))

    print("KERNEL_OK")
</pallas_src>

<mosaic_0001>
module attributes {stable_mosaic.version = 11 : i64} {
  func.func @_sublayer_connection_kernel(%arg0: i32, %arg1: memref<1xi32, #tpu.memory_space<smem>>, %arg2: memref<256x128xf32, #tpu.memory_space<vmem>>, %arg3: memref<1x128xf32, #tpu.memory_space<vmem>>, %arg4: memref<1x128xf32, #tpu.memory_space<vmem>>, %arg5: memref<128x128xbf16, #tpu.memory_space<vmem>>, %arg6: memref<1x128xf32, #tpu.memory_space<vmem>>, %arg7: memref<256x128xf32, #tpu.memory_space<vmem>>) attributes {dimension_semantics = [#tpu.dimension_semantics<parallel>], iteration_bounds = array<i64: 2>, scalar_prefetch = 1 : i64, scratch_operands = 0 : i64, tpu.core_type = #tpu.core_type<tc>, window_params = [{transform_indices = @transform_0, window_bounds = array<i64: 256, 128>}, {pipeline_mode = #tpu.pipeline_mode<synchronous>, transform_indices = @transform_1, window_bounds = array<i64: 1, 128>}, {pipeline_mode = #tpu.pipeline_mode<synchronous>, transform_indices = @transform_2, window_bounds = array<i64: 1, 128>}, {pipeline_mode = #tpu.pipeline_mode<synchronous>, transform_indices = @transform_3, window_bounds = array<i64: 128, 128>}, {pipeline_mode = #tpu.pipeline_mode<synchronous>, transform_indices = @transform_4, window_bounds = array<i64: 1, 128>}, {transform_indices = @transform_5, window_bounds = array<i64: 256, 128>}]} {
    %c0 = arith.constant 0 : index
    %c0_0 = arith.constant 0 : index
    %0 = vector.load %arg2[%c0, %c0_0] : memref<256x128xf32, #tpu.memory_space<vmem>>, vector<256x128xf32>
    %cst = arith.constant dense<0.000000e+00> : vector<256xf32>
    %1 = vector.multi_reduction <add>, %0, %cst [1] : vector<256x128xf32> to vector<256xf32>
    %2 = vector.shape_cast %1 : vector<256xf32> to vector<256x1xf32>
    %cst_1 = arith.constant 1.280000e+02 : f32
    %3 = vector.broadcast %cst_1 : f32 to vector<256x1xf32>
    %4 = arith.divf %2, %3 : vector<256x1xf32>
    %5 = vector.broadcast %4 : vector<256x1xf32> to vector<256x128xf32>
    %6 = arith.subf %0, %5 : vector<256x128xf32>
    %7 = arith.mulf %6, %6 : vector<256x128xf32>
    %cst_2 = arith.constant dense<0.000000e+00> : vector<256xf32>
    %8 = vector.multi_reduction <add>, %7, %cst_2 [1] : vector<256x128xf32> to vector<256xf32>
    %9 = vector.shape_cast %8 : vector<256xf32> to vector<256x1xf32>
    %cst_3 = arith.constant 1.280000e+02 : f32
    %10 = vector.broadcast %cst_3 : f32 to vector<256x1xf32>
    %11 = arith.divf %9, %10 : vector<256x1xf32>
    %cst_4 = arith.constant 9.99999974E-6 : f32
    %12 = vector.broadcast %cst_4 : f32 to vector<256x1xf32>
    %13 = arith.addf %11, %12 : vector<256x1xf32>
    %14 = math.rsqrt %13 : vector<256x1xf32>
    %15 = vector.broadcast %14 : vector<256x1xf32> to vector<256x128xf32>
    %16 = arith.mulf %6, %15 : vector<256x128xf32>
    %c0_5 = arith.constant 0 : index
    %c0_6 = arith.constant 0 : index
    %17 = vector.load %arg3[%c0_5, %c0_6] : memref<1x128xf32, #tpu.memory_space<vmem>>, vector<1x128xf32>
    %18 = vector.broadcast %17 : vector<1x128xf32> to vector<256x128xf32>
    %19 = arith.mulf %16, %18 : vector<256x128xf32>
    %c0_7 = arith.constant 0 : index
    %c0_8 = arith.constant 0 : index
    %20 = vector.load %arg4[%c0_7, %c0_8] : memref<1x128xf32, #tpu.memory_space<vmem>>, vector<1x128xf32>
    %21 = vector.broadcast %20 : vector<1x128xf32> to vector<256x128xf32>
    %22 = arith.addf %19, %21 : vector<256x128xf32>
    %23 = arith.truncf %22 : vector<256x128xf32> to vector<256x128xbf16>
    %c0_9 = arith.constant 0 : index
    %c0_10 = arith.constant 0 : index
    %24 = vector.load %arg5[%c0_9, %c0_10] : memref<128x128xbf16, #tpu.memory_space<vmem>>, vector<128x128xbf16>
    %cst_11 = arith.constant dense<0.000000e+00> : vector<256x128xf32>
    %25 = tpu.matmul %23, %24, %cst_11 {dimension_numbers = #tpu.dot_dimension_numbers<[1], [0], [0], [1], [0, 0, 1, 1], [], []>} : vector<256x128xbf16>, vector<128x128xbf16>, vector<256x128xf32> -> vector<256x128xf32>
    %c0_12 = arith.constant 0 : index
    %c0_13 = arith.constant 0 : index
    %26 = vector.load %arg6[%c0_12, %c0_13] : memref<1x128xf32, #tpu.memory_space<vmem>>, vector<1x128xf32>
    %27 = vector.broadcast %26 : vector<1x128xf32> to vector<256x128xf32>
    %28 = arith.addf %25, %27 : vector<256x128xf32>
    %29 = arith.addf %0, %28 : vector<256x128xf32>
    %c0_14 = arith.constant 0 : index
    %c0_15 = arith.constant 0 : index
    %30 = vector.load %arg7[%c0_14, %c0_15] : memref<256x128xf32, #tpu.memory_space<vmem>>, vector<256x128xf32>
    tpu.vector_store %arg7[%c0_14, %c0_15], %29 {strides = array<i32>} : memref<256x128xf32, #tpu.memory_space<vmem>>, vector<256x128xf32>,
    return
  }
  func.func @transform_0(%arg0: i32, %arg1: memref<1xi32, #tpu.memory_space<smem>>) -> (i32, i32) {
    %c0_i32 = arith.constant 0 : i32
    %c0_i32_0 = arith.constant 0 : i32
    return %arg0, %c0_i32 : i32, i32
  }
  func.func @transform_1(%arg0: i32, %arg1: memref<1xi32, #tpu.memory_space<smem>>) -> (i32, i32) {
    %c0_i32 = arith.constant 0 : i32
    %c0_i32_0 = arith.constant 0 : i32
    %c0_i32_1 = arith.constant 0 : i32
    return %c0_i32, %c0_i32_0 : i32, i32
  }
  func.func @transform_2(%arg0: i32, %arg1: memref<1xi32, #tpu.memory_space<smem>>) -> (i32, i32) {
    %c0_i32 = arith.constant 0 : i32
    %c0_i32_0 = arith.constant 0 : i32
    %c0_i32_1 = arith.constant 0 : i32
    return %c0_i32, %c0_i32_0 : i32, i32
  }
  func.func @transform_3(%arg0: i32, %arg1: memref<1xi32, #tpu.memory_space<smem>>) -> (i32, i32) {
    %c0_i32 = arith.constant 0 : i32
    %c0_i32_0 = arith.constant 0 : i32
    %c0_i32_1 = arith.constant 0 : i32
    return %c0_i32, %c0_i32_0 : i32, i32
  }
  func.func @transform_4(%arg0: i32, %arg1: memref<1xi32, #tpu.memory_space<smem>>) -> (i32, i32) {
    %c0_i32 = arith.constant 0 : i32
    %c0_i32_0 = arith.constant 0 : i32
    %c0_i32_1 = arith.constant 0 : i32
    return %c0_i32, %c0_i32_0 : i32, i32
  }
  func.func @transform_5(%arg0: i32, %arg1: memref<1xi32, #tpu.memory_space<smem>>) -> (i32, i32) {
    %c0_i32 = arith.constant 0 : i32
    %c0_i32_0 = arith.constant 0 : i32
    return %arg0, %c0_i32 : i32, i32
  }
}

</mosaic_0001>

<llo_original>
// kernel: tpu_custom_call.1
$region0: #{tpu_custom_call.1}
  #allocation0 [shape = 'u32[]', space=smem, size = 0x4, offset = 0x4, fixed_abs, tag = 'smem constant byte address 0x4 - core index']
  #allocation1 [shape = 'u32[144,128]{1,0:T(1,128)}', space=vmem, size = 0x12000, scoped, tag = 'internal scratch']
  #allocation2 [shape = 's32[1]{0}', space=sflag, size = 0x4, scoped, tag = 'scoped memory for tpu_custom_call.1']
  #allocation3 [shape = 's32[1]{0:T(128)S(6)}', space=smem, size = 0x200, scoped, tag = 'prefetched SMEM operand 0']
  %s0 = inlined_call_operand.<no memory space> [shape: s32[1], index: 0, kind: input, shape index: {}]
  %s1 = inlined_call_operand.hbm [shape: f32[512,128], index: 1, kind: input, shape index: {}]
  %s2 = inlined_call_operand.vmem [shape: f32[1,128], index: 2, kind: input, shape index: {}]
  %s3 = inlined_call_operand.vmem [shape: f32[1,128], index: 3, kind: input, shape index: {}]
  %s4 = inlined_call_operand.hbm [shape: bf16[128,128], index: 4, kind: input, shape index: {}]
  %s5 = inlined_call_operand.vmem [shape: f32[1,128], index: 5, kind: input, shape index: {}]
  %s6 = inlined_call_operand.hbm [shape: f32[512,128], index: 6, kind: output, shape index: {}]
  %s7 = sld [smem:[#allocation0]]
  $region61: #{tpu_custom_call.1} parent=0
    _
  %s9 = ssub.s32 1, %s7
  %s10 = scalar_select 0, %s9, %s7
  %11 = sst [smem:[#allocation3]] %s0
  $region1: #{tpu_custom_call.1} parent=0
    #allocation4 [shape = 'u8[262144]{0}', space=vmem, size = 0x40000, scoped, tag = 'input window, operand 1']
    #allocation5 [shape = 's32[2]{0}', space=sflag, size = 0x8, scoped, tag = 'scoped memory for tpu_custom_call.1']
    #allocation6 [shape = 's32[2]{0}', space=sflag, size = 0x8, scoped, tag = 'scoped memory for tpu_custom_call.1']
    #allocation7 [shape = 'u8[32768]{0}', space=vmem, size = 0x8000, scoped, tag = 'input window, operand 4, single buffered']
    #allocation8 [shape = 's32[1]{0}', space=sflag, size = 0x4, scoped, tag = 'scoped memory for tpu_custom_call.1']
    #allocation9 [shape = 'u8[262144]{0}', space=vmem, size = 0x40000, scoped, tag = 'output window, operand 0']
    %12 = vsyncpa [#allocation5], 0
    %s13 = scalar_lea.sflag [#allocation5], 1
    %14 = vsyncpa %s13, 0
    %15 = vsyncpa [#allocation8], 0
    %16 = vsyncpa [#allocation6], 0
    %s17 = scalar_lea.sflag [#allocation6], 1
    %18 = vsyncpa %s17, 0
    loop: start=0, step=1, limit=4
    $region2: #{tpu_custom_call.1} parent=1 // loop_pre_header
      _
    $region3: #{tpu_custom_call.1} parent=1 // loop_header
      %s20 = sphi 0, %s24
      %p21 = scmp.ge.s32.totalorder %s20, 4
      %s30 = sphi 0, %s32
      %s33 = sphi 0, %s30
      %s34 = sphi 0, %s33
      %s50 = sphi 0, %s34
      %s54 = sphi 0, %s54
      %s56 = sphi 0, %s54
      %s57 = sphi 0, %s56
      %s71 = sphi 0, %s57
      %s75 = sphi 0, %s75
      %s77 = sphi 0, %s75
      %s78 = sphi 0, %s77
      %s92 = sphi 0, %s78
      %s96 = sphi 0, %s96
      %s98 = sphi 0, %s96
      %s99 = sphi 0, %s98
      %s113 = sphi 0, %s99
      %s117 = sphi 0, %s117
      %s119 = sphi 0, %s117
      %s120 = sphi 0, %s119
      %s134 = sphi 0, %s120
      %s140 = sphi 0, %s142
      %s143 = sphi 0, %s140
      %s144 = sphi 0, %s143
      %s160 = sphi 0, %s144
    $region4: #{tpu_custom_call.1} parent=1 // loop_header_branch
      %23 = sbr.rel (%p21) target = $region8
    $region5: #{tpu_custom_call.1} parent=1 // loop_body
      %s25 = ssub.s32 %s20, 1
      %s26 = ssub.s32 %s20, 2
      %s27 = sadd.s32 %s20, 1
      %s28 = ssub.s32 %s20, %s27
      %p29 = scmp.eq.s32.totalorder %s28, 0
      %s31 = sadd.s32 %s30, 1
      %s32 = scalar_select %p29, %s30, %s31
      %p35 = pneg %p29
      %p36 = scmp.eq.s32.totalorder %s20, 1
      %p37 = por %p35, %p36
      %p38 = scmp.ne.s32.totalorder %s30, %s33
      %p39 = scmp.eq.s32.totalorder %s20, 0
      %p40 = por %p38, %p39
      %p41 = scmp.ne.s32.totalorder %s30, %s33
      %p42 = scmp.eq.s32.totalorder %s25, 1
      %p43 = por %p41, %p42
      %p44 = scmp.ne.s32.totalorder %s33, %s34
      %p45 = scmp.eq.s32.totalorder %s25, 0
      %p46 = por %p44, %p45
      %p47 = scmp.ne.s32.totalorder %s33, %s34
      %p48 = scmp.eq.s32.totalorder %s26, 1
      %p49 = por %p47, %p48
      %p51 = scmp.ne.s32.totalorder %s34, %s50
      %p52 = scmp.eq.s32.totalorder %s26, 0
      %p53 = por %p51, %p52
      %s55 = sadd.s32 %s54, 1
      %p58 = scmp.eq.s32.totalorder %s20, 1
      %p59 = scmp.ne.s32.totalorder %s54, %s56
      %p60 = scmp.eq.s32.totalorder %s20, 0
      %p61 = por %p59, %p60
      %p62 = scmp.ne.s32.totalorder %s54, %s56
      %p63 = scmp.eq.s32.totalorder %s25, 1
      %p64 = por %p62, %p63
      %p65 = scmp.ne.s32.totalorder %s56, %s57
      %p66 = scmp.eq.s32.totalorder %s25, 0
      %p67 = por %p65, %p66
      %p68 = scmp.ne.s32.totalorder %s56, %s57
      %p69 = scmp.eq.s32.totalorder %s26, 1
      %p70 = por %p68, %p69
      %p72 = scmp.ne.s32.totalorder %s57, %s71
      %p73 = scmp.eq.s32.totalorder %s26, 0
      %p74 = por %p72, %p73
      %s76 = sadd.s32 %s75, 1
      %p79 = scmp.eq.s32.totalorder %s20, 1
      %p80 = scmp.ne.s32.totalorder %s75, %s77
      %p81 = scmp.eq.s32.totalorder %s20, 0
      %p82 = por %p80, %p81
      %p83 = scmp.ne.s32.totalorder %s75, %s77
      %p84 = scmp.eq.s32.totalorder %s25, 1
      %p85 = por %p83, %p84
      %p86 = scmp.ne.s32.totalorder %s77, %s78
      %p87 = scmp.eq.s32.totalorder %s25, 0
      %p88 = por %p86, %p87
      %p89 = scmp.ne.s32.totalorder %s77, %s78
      %p90 = scmp.eq.s32.totalorder %s26, 1
      %p91 = por %p89, %p90
      %p93 = scmp.ne.s32.totalorder %s78, %s92
      %p94 = scmp.eq.s32.totalorder %s26, 0
      %p95 = por %p93, %p94
      %s97 = sadd.s32 %s96, 1
      %p100 = scmp.eq.s32.totalorder %s20, 1
      %p101 = scmp.ne.s32.totalorder %s96, %s98
      %p102 = scmp.eq.s32.totalorder %s20, 0
      %p103 = por %p101, %p102
      %p104 = scmp.ne.s32.totalorder %s96, %s98
      %p105 = scmp.eq.s32.totalorder %s25, 1
      %p106 = por %p104, %p105
      %p107 = scmp.ne.s32.totalorder %s98, %s99
      %p108 = scmp.eq.s32.totalorder %s25, 0
      %p109 = por %p107, %p108
      %p110 = scmp.ne.s32.totalorder %s98, %s99
      %p111 = scmp.eq.s32.totalorder %s26, 1
      %p112 = por %p110, %p111
      %p114 = scmp.ne.s32.totalorder %s99, %s113
      %p115 = scmp.eq.s32.totalorder %s26, 0
      %p116 = por %p114, %p115
      %s118 = sadd.s32 %s117, 1
      %p121 = scmp.eq.s32.totalorder %s20, 1
      %p122 = scmp.ne.s32.totalorder %s117, %s119
      %p123 = scmp.eq.s32.totalorder %s20, 0
      %p124 = por %p122, %p123
      %p125 = scmp.ne.s32.totalorder %s117, %s119
      %p126 = scmp.eq.s32.totalorder %s25, 1
      %p127 = por %p125, %p126
      %p128 = scmp.ne.s32.totalorder %s119, %s120
      %p129 = scmp.eq.s32.totalorder %s25, 0
      %p130 = por %p128, %p129
      %p131 = scmp.ne.s32.totalorder %s119, %s120
      %p132 = scmp.eq.s32.totalorder %s26, 1
      %p133 = por %p131, %p132
      %p135 = scmp.ne.s32.totalorder %s120, %s134
      %p136 = scmp.eq.s32.totalorder %s26, 0
      %p137 = por %p135, %p136
      %s138 = ssub.s32 %s20, %s27
      %p139 = scmp.eq.s32.totalorder %s138, 0
      %s141 = sadd.s32 %s140, 1
      %s142 = scalar_select %p139, %s140, %s141
      %p145 = pneg %p139
      %p146 = scmp.eq.s32.totalorder %s20, 1
      %p147 = por %p145, %p146
      %p148 = scmp.ne.s32.totalorder %s140, %s143
      %p149 = scmp.eq.s32.totalorder %s20, 0
      %p150 = por %p148, %p149
      %p151 = scmp.ne.s32.totalorder %s140, %s143
      %p152 = scmp.eq.s32.totalorder %s25, 1
      %p153 = por %p151, %p152
      %p154 = scmp.ne.s32.totalorder %s143, %s144
      %p155 = scmp.eq.s32.totalorder %s25, 0
      %p156 = por %p154, %p155
      %p157 = scmp.ne.s32.totalorder %s143, %s144
      %p158 = scmp.eq.s32.totalorder %s26, 1
      %p159 = por %p157, %p158
      %p161 = scmp.ne.s32.totalorder %s144, %s160
      %p162 = scmp.eq.s32.totalorder %s26, 0
      %p163 = por %p161, %p162
      %p164 = scmp.le.s32.totalorder 1, %s20
      %p165 = scmp.lt.s32.totalorder %s20, 3
      %p166 = pnand %p164, %p165
      %p167 = pneg %p166
      // Predicated region
      $region9: #{tpu_custom_call.1} parent=5 // pred_check
        _
      $region10: #{tpu_custom_call.1} parent=5 // pred_check_branch
        %169 = sbr.rel (%p166) target = $region12
      $region11: #{tpu_custom_call.1} parent=5 // pred_region
        %s170 = ssub.s32 %s20, 1
        // Predicated region
        $region13: #{tpu_custom_call.1} parent=11 // pred_check
          %p171 = pneg %p67
        $region14: #{tpu_custom_call.1} parent=11 // pred_check_branch
          %173 = sbr.rel (%p171) target = $region16
        $region15: #{tpu_custom_call.1} parent=11 // pred_region
          _
        $region16: #{tpu_custom_call.1} parent=11 // pred_fallthru
          _
        // Predicated region
        $region17: #{tpu_custom_call.1} parent=11 // pred_check
          %p174 = pneg %p88
        $region18: #{tpu_custom_call.1} parent=11 // pred_check_branch
          %176 = sbr.rel (%p174) target = $region20
        $region19: #{tpu_custom_call.1} parent=11 // pred_region
          _
        $region20: #{tpu_custom_call.1} parent=11 // pred_fallthru
          _
        // Predicated region
        $region21: #{tpu_custom_call.1} parent=11 // pred_check
          %p177 = pneg %p109
        $region22: #{tpu_custom_call.1} parent=11 // pred_check_branch
          %179 = sbr.rel (%p177) target = $region24
        $region23: #{tpu_custom_call.1} parent=11 // pred_region
          %s181 = ssub.s32 1024, 1024
          %182 = vsyncadd [#allocation8], %s181
          %s183 = sshll.u32 [#allocation7], 4
          %s184 = int_to_ptr.vmem [resolvable:$true] %s183
          %189 = dma.hbm_to_vmem [thread:$0]  %s4, 1024, %s184, [#allocation8], 64, 64, 4
        $region24: #{tpu_custom_call.1} parent=11 // pred_fallthru
          _
        // Predicated region
        $region25: #{tpu_custom_call.1} parent=11 // pred_check
          %p190 = pneg %p130
        $region26: #{tpu_custom_call.1} parent=11 // pred_check_branch
          %192 = sbr.rel (%p190) target = $region28
        $region27: #{tpu_custom_call.1} parent=11 // pred_region
          _
        $region28: #{tpu_custom_call.1} parent=11 // pred_fallthru
          _
      $region12: #{tpu_custom_call.1} parent=5 // pred_fallthru
        _
      %p193 = scmp.lt.s32.totalorder %s20, 2
      // Predicated region
      $region29: #{tpu_custom_call.1} parent=5 // pred_check
        %p194 = pneg %p193
      $region30: #{tpu_custom_call.1} parent=5 // pred_check_branch
        %196 = sbr.rel (%p194) target = $region32
      $region31: #{tpu_custom_call.1} parent=5 // pred_region
        // Predicated region
        $region33: #{tpu_custom_call.1} parent=31 // pred_check
          %p197 = pneg %p40
        $region34: #{tpu_custom_call.1} parent=31 // pred_check_branch
          %199 = sbr.rel (%p197) target = $region36
        $region35: #{tpu_custom_call.1} parent=31 // pred_region
          %s200 = sand.u32 %s30, 1
          %s201 = scalar_lea.sflag [#allocation5], %s200
          %s202 = sand.u32 %s30, 1
          %s203 = smul.addr %s202, 256
          %s204 = scalar_lea.vmem [#allocation4], %s203
          %s205 = smul.u32 32, %s20
          %s207 = ssub.s32 4096, 4096
          %208 = vsyncadd %s201, %s207
          %s209 = smul.addr %s205, 128
          %s210 = scalar_lea.hbm %s1, %s209
          %s211 = sshll.u32 %s204, 4
          %s212 = int_to_ptr.vmem [resolvable:$true] %s211
          %217 = dma.hbm_to_vmem [thread:$0]  %s210, 4096, %s212, %s201, 128, 128, 8
        $region36: #{tpu_custom_call.1} parent=31 // pred_fallthru
          _
      $region32: #{tpu_custom_call.1} parent=5 // pred_fallthru
        _
      %p218 = scmp.le.s32.totalorder 1, %s20
      %p219 = scmp.lt.s32.totalorder %s20, 3
      %p220 = pnand %p218, %p219
      %p221 = pneg %p220
      // Predicated region
      $region37: #{tpu_custom_call.1} parent=5 // pred_check
        _
      $region38: #{tpu_custom_call.1} parent=5 // pred_check_branch
        %223 = sbr.rel (%p220) target = $region40
      $region39: #{tpu_custom_call.1} parent=5 // pred_region
        %s224 = ssub.s32 %s20, 1
        %s225 = sand.u32 %s33, 1
        %s226 = scalar_lea.sflag [#allocation5], %s225
        %s227 = sand.u32 %s33, 1
        %s228 = smul.addr %s227, 256
        %s229 = scalar_lea.vmem [#allocation4], %s228
        // Predicated region
        $region41: #{tpu_custom_call.1} parent=39 // pred_check
          %p230 = pneg %p46
        $region42: #{tpu_custom_call.1} parent=39 // pred_check_branch
          %232 = sbr.rel (%p230) target = $region44
        $region43: #{tpu_custom_call.1} parent=39 // pred_region
          %233 = dma.done %s226, 4096
        $region44: #{tpu_custom_call.1} parent=39 // pred_fallthru
          _
        // Predicated region
        $region45: #{tpu_custom_call.1} parent=39 // pred_check
          %p234 = pneg %p109
        $region46: #{tpu_custom_call.1} parent=39 // pred_check_branch
          %236 = sbr.rel (%p234) target = $region48
        $region47: #{tpu_custom_call.1} parent=39 // pred_region
          %237 = dma.done [#allocation8], 1024
        $region48: #{tpu_custom_call.1} parent=39 // pred_fallthru
          _
        %s238 = sand.u32 %s33, 1
        %s239 = scalar_lea.sflag [#allocation5], %s238
        %s240 = sand.u32 %s33, 1
        %s241 = smul.addr %s240, 256
        %s242 = scalar_lea.vmem [#allocation4], %s241
        %p243 = pneg %p46
        %p244 = pneg %p43
        %p245 = pneg %p67
        %p246 = pneg %p64
        %p247 = pneg %p88
        %p248 = pneg %p85
        %p249 = pneg %p109
        %p250 = pneg %p106
        %p251 = pneg %p130
        %p252 = pneg %p127
        %p253 = pneg %p156
        %p254 = pneg %p153
        %s255 = sand.u32 %s143, 1
        %s256 = scalar_lea.sflag [#allocation6], %s255
        %s257 = sand.u32 %s143, 1
        %s258 = smul.addr %s257, 256
        %s259 = scalar_lea.vmem [#allocation9], %s258
        %s260 = smul.u32 32, %s25
        %s261 = smul.u32 32, %s25
        %v263 = vld [vmem:[%s229] sm:$0xff]
        %v264 = vld [vmem:[%s229 + $0x8] sm:$0xff]
        %v265 = vld [vmem:[%s229 + $0x10] sm:$0xff]
        %v266 = vld [vmem:[%s229 + $0x18] sm:$0xff]
        %v267 = vld [vmem:[%s229 + $0x20] sm:$0xff]
        %v268 = vld [vmem:[%s229 + $0x28] sm:$0xff]
        %v269 = vld [vmem:[%s229 + $0x30] sm:$0xff]
        %v270 = vld [vmem:[%s229 + $0x38] sm:$0xff]
        %v271 = vld [vmem:[%s229 + $0x40] sm:$0xff]
        %v272 = vld [vmem:[%s229 + $0x48] sm:$0xff]
        %v273 = vld [vmem:[%s229 + $0x50] sm:$0xff]
        %v274 = vld [vmem:[%s229 + $0x58] sm:$0xff]
        %v275 = vld [vmem:[%s229 + $0x60] sm:$0xff]
        %v276 = vld [vmem:[%s229 + $0x68] sm:$0xff]
        %v277 = vld [vmem:[%s229 + $0x70] sm:$0xff]
        %v278 = vld [vmem:[%s229 + $0x78] sm:$0xff]
        %v279 = vld [vmem:[%s229 + $0x80] sm:$0xff]
        %v280 = vld [vmem:[%s229 + $0x88] sm:$0xff]
        %v281 = vld [vmem:[%s229 + $0x90] sm:$0xff]
        %v282 = vld [vmem:[%s229 + $0x98] sm:$0xff]
        %v283 = vld [vmem:[%s229 + $0xa0] sm:$0xff]
        %v284 = vld [vmem:[%s229 + $0xa8] sm:$0xff]
        %v285 = vld [vmem:[%s229 + $0xb0] sm:$0xff]
        %v286 = vld [vmem:[%s229 + $0xb8] sm:$0xff]
        %v287 = vld [vmem:[%s229 + $0xc0] sm:$0xff]
        %v288 = vld [vmem:[%s229 + $0xc8] sm:$0xff]
        %v289 = vld [vmem:[%s229 + $0xd0] sm:$0xff]
        %v290 = vld [vmem:[%s229 + $0xd8] sm:$0xff]
        %v291 = vld [vmem:[%s229 + $0xe0] sm:$0xff]
        %v292 = vld [vmem:[%s229 + $0xe8] sm:$0xff]
        %v293 = vld [vmem:[%s229 + $0xf0] sm:$0xff]
        %v294 = vld [vmem:[%s229 + $0xf8] sm:$0xff]
        %295 = vadd.xlane.f32.xlu0 %v263
        %v296 = vpop.xlane.xlu0 %295
        %297 = vadd.xlane.f32.xlu0 %v264
        %v298 = vpop.xlane.xlu0 %297
        %299 = vadd.xlane.f32.xlu0 %v265
        %v300 = vpop.xlane.xlu0 %299
        %301 = vadd.xlane.f32.xlu0 %v266
        %v302 = vpop.xlane.xlu0 %301
        %303 = vadd.xlane.f32.xlu0 %v267
        %v304 = vpop.xlane.xlu0 %303
        %305 = vadd.xlane.f32.xlu0 %v268
        %v306 = vpop.xlane.xlu0 %305
        %307 = vadd.xlane.f32.xlu0 %v269
        %v308 = vpop.xlane.xlu0 %307
        %309 = vadd.xlane.f32.xlu0 %v270
        %v310 = vpop.xlane.xlu0 %309
        %311 = vadd.xlane.f32.xlu0 %v271
        %v312 = vpop.xlane.xlu0 %311
        %313 = vadd.xlane.f32.xlu0 %v272
        %v314 = vpop.xlane.xlu0 %313
        %315 = vadd.xlane.f32.xlu0 %v273
        %v316 = vpop.xlane.xlu0 %315
        %317 = vadd.xlane.f32.xlu0 %v274
        %v318 = vpop.xlane.xlu0 %317
        %319 = vadd.xlane.f32.xlu0 %v275
        %v320 = vpop.xlane.xlu0 %319
        %321 = vadd.xlane.f32.xlu0 %v276
        %v322 = vpop.xlane.xlu0 %321
        %323 = vadd.xlane.f32.xlu0 %v277
        %v324 = vpop.xlane.xlu0 %323
        %325 = vadd.xlane.f32.xlu0 %v278
        %v326 = vpop.xlane.xlu0 %325
        %327 = vadd.xlane.f32.xlu0 %v279
        %v328 = vpop.xlane.xlu0 %327
        %329 = vadd.xlane.f32.xlu0 %v280
        %v330 = vpop.xlane.xlu0 %329
        %331 = vadd.xlane.f32.xlu0 %v281
        %v332 = vpop.xlane.xlu0 %331
        %333 = vadd.xlane.f32.xlu0 %v282
        %v334 = vpop.xlane.xlu0 %333
        %335 = vadd.xlane.f32.xlu0 %v283
        %v336 = vpop.xlane.xlu0 %335
        %337 = vadd.xlane.f32.xlu0 %v284
        %v338 = vpop.xlane.xlu0 %337
        %339 = vadd.xlane.f32.xlu0 %v285
        %v340 = vpop.xlane.xlu0 %339
        %341 = vadd.xlane.f32.xlu0 %v286
        %v342 = vpop.xlane.xlu0 %341
        %343 = vadd.xlane.f32.xlu0 %v287
        %v344 = vpop.xlane.xlu0 %343
        %345 = vadd.xlane.f32.xlu0 %v288
        %v346 = vpop.xlane.xlu0 %345
        %347 = vadd.xlane.f32.xlu0 %v289
        %v348 = vpop.xlane.xlu0 %347
        %349 = vadd.xlane.f32.xlu0 %v290
        %v350 = vpop.xlane.xlu0 %349
        %351 = vadd.xlane.f32.xlu0 %v291
        %v352 = vpop.xlane.xlu0 %351
        %353 = vadd.xlane.f32.xlu0 %v292
        %v354 = vpop.xlane.xlu0 %353
        %355 = vadd.xlane.f32.xlu0 %v293
        %v356 = vpop.xlane.xlu0 %355
        %357 = vadd.xlane.f32.xlu0 %v294
        %v358 = vpop.xlane.xlu0 %357
        %v359 = vrcp.pop 128.0
        %v360 = vmul.f32 %v296, %v359
        %v361 = vmul.f32 %v298, %v359
        %v362 = vmul.f32 %v300, %v359
        %v363 = vmul.f32 %v302, %v359
        %v364 = vmul.f32 %v304, %v359
        %v365 = vmul.f32 %v306, %v359
        %v366 = vmul.f32 %v308, %v359
        %v367 = vmul.f32 %v310, %v359
        %v368 = vmul.f32 %v312, %v359
        %v369 = vmul.f32 %v314, %v359
        %v370 = vmul.f32 %v316, %v359
        %v371 = vmul.f32 %v318, %v359
        %v372 = vmul.f32 %v320, %v359
        %v373 = vmul.f32 %v322, %v359
        %v374 = vmul.f32 %v324, %v359
        %v375 = vmul.f32 %v326, %v359
        %v376 = vmul.f32 %v328, %v359
        %v377 = vmul.f32 %v330, %v359
        %v378 = vmul.f32 %v332, %v359
        %v379 = vmul.f32 %v334, %v359
        %v380 = vmul.f32 %v336, %v359
        %v381 = vmul.f32 %v338, %v359
        %v382 = vmul.f32 %v340, %v359
        %v383 = vmul.f32 %v342, %v359
        %v384 = vmul.f32 %v344, %v359
        %v385 = vmul.f32 %v346, %v359
        %v386 = vmul.f32 %v348, %v359
        %v387 = vmul.f32 %v350, %v359
        %v388 = vmul.f32 %v352, %v359
        %v389 = vmul.f32 %v354, %v359
        %v390 = vmul.f32 %v356, %v359
        %v391 = vmul.f32 %v358, %v359
        %v392 = vsub.f32 %v263, %v360
        %v393 = vsub.f32 %v264, %v361
        %v394 = vsub.f32 %v265, %v362
        %v395 = vsub.f32 %v266, %v363
        %v396 = vsub.f32 %v267, %v364
        %v397 = vsub.f32 %v268, %v365
        %v398 = vsub.f32 %v269, %v366
        %v399 = vsub.f32 %v270, %v367
        %v400 = vsub.f32 %v271, %v368
        %v401 = vsub.f32 %v272, %v369
        %v402 = vsub.f32 %v273, %v370
        %v403 = vsub.f32 %v274, %v371
        %v404 = vsub.f32 %v275, %v372
        %v405 = vsub.f32 %v276, %v373
        %v406 = vsub.f32 %v277, %v374
        %v407 = vsub.f32 %v278, %v375
        %v408 = vsub.f32 %v279, %v376
        %v409 = vsub.f32 %v280, %v377
        %v410 = vsub.f32 %v281, %v378
        %v411 = vsub.f32 %v282, %v379
        %v412 = vsub.f32 %v283, %v380
        %v413 = vsub.f32 %v284, %v381
        %v414 = vsub.f32 %v285, %v382
        %v415 = vsub.f32 %v286, %v383
        %v416 = vsub.f32 %v287, %v384
        %v417 = vsub.f32 %v288, %v385
        %v418 = vsub.f32 %v289, %v386
        %v419 = vsub.f32 %v290, %v387
        %v420 = vsub.f32 %v291, %v388
        %v421 = vsub.f32 %v292, %v389
        %v422 = vsub.f32 %v293, %v390
        %v423 = vsub.f32 %v294, %v391
        %v424 = vmul.f32 %v392, %v392
        %v425 = vmul.f32 %v393, %v393
        %v426 = vmul.f32 %v394, %v394
        %v427 = vmul.f32 %v395, %v395
        %v428 = vmul.f32 %v396, %v396
        %v429 = vmul.f32 %v397, %v397
        %v430 = vmul.f32 %v398, %v398
        %v431 = vmul.f32 %v399, %v399
        %v432 = vmul.f32 %v400, %v400
        %v433 = vmul.f32 %v401, %v401
        %v434 = vmul.f32 %v402, %v402
        %v435 = vmul.f32 %v403, %v403
        %v436 = vmul.f32 %v404, %v404
        %v437 = vmul.f32 %v405, %v405
        %v438 = vmul.f32 %v406, %v406
        %v439 = vmul.f32 %v407, %v407
        %v440 = vmul.f32 %v408, %v408
        %v441 = vmul.f32 %v409, %v409
        %v442 = vmul.f32 %v410, %v410
        %v443 = vmul.f32 %v411, %v411
        %v444 = vmul.f32 %v412, %v412
        %v445 = vmul.f32 %v413, %v413
        %v446 = vmul.f32 %v414, %v414
        %v447 = vmul.f32 %v415, %v415
        %v448 = vmul.f32 %v416, %v416
        %v449 = vmul.f32 %v417, %v417
        %v450 = vmul.f32 %v418, %v418
        %v451 = vmul.f32 %v419, %v419
        %v452 = vmul.f32 %v420, %v420
        %v453 = vmul.f32 %v421, %v421
        %v454 = vmul.f32 %v422, %v422
        %v455 = vmul.f32 %v423, %v423
        %456 = vadd.xlane.f32.xlu0 %v424
        %v457 = vpop.xlane.xlu0 %456
        %458 = vadd.xlane.f32.xlu0 %v425
        %v459 = vpop.xlane.xlu0 %458
        %460 = vadd.xlane.f32.xlu0 %v426
        %v461 = vpop.xlane.xlu0 %460
        %462 = vadd.xlane.f32.xlu0 %v427
        %v463 = vpop.xlane.xlu0 %462
        %464 = vadd.xlane.f32.xlu0 %v428
        %v465 = vpop.xlane.xlu0 %464
        %466 = vadd.xlane.f32.xlu0 %v429
        %v467 = vpop.xlane.xlu0 %466
        %468 = vadd.xlane.f32.xlu0 %v430
        %v469 = vpop.xlane.xlu0 %468
        %470 = vadd.xlane.f32.xlu0 %v431
        %v471 = vpop.xlane.xlu0 %470
        %472 = vadd.xlane.f32.xlu0 %v432
        %v473 = vpop.xlane.xlu0 %472
        %474 = vadd.xlane.f32.xlu0 %v433
        %v475 = vpop.xlane.xlu0 %474
        %476 = vadd.xlane.f32.xlu0 %v434
        %v477 = vpop.xlane.xlu0 %476
        %478 = vadd.xlane.f32.xlu0 %v435
        %v479 = vpop.xlane.xlu0 %478
        %480 = vadd.xlane.f32.xlu0 %v436
        %v481 = vpop.xlane.xlu0 %480
        %482 = vadd.xlane.f32.xlu0 %v437
        %v483 = vpop.xlane.xlu0 %482
        %484 = vadd.xlane.f32.xlu0 %v438
        %v485 = vpop.xlane.xlu0 %484
        %486 = vadd.xlane.f32.xlu0 %v439
        %v487 = vpop.xlane.xlu0 %486
        %488 = vadd.xlane.f32.xlu0 %v440
        %v489 = vpop.xlane.xlu0 %488
        %490 = vadd.xlane.f32.xlu0 %v441
        %v491 = vpop.xlane.xlu0 %490
        %492 = vadd.xlane.f32.xlu0 %v442
        %v493 = vpop.xlane.xlu0 %492
        %494 = vadd.xlane.f32.xlu0 %v443
        %v495 = vpop.xlane.xlu0 %494
        %496 = vadd.xlane.f32.xlu0 %v444
        %v497 = vpop.xlane.xlu0 %496
        %498 = vadd.xlane.f32.xlu0 %v445
        %v499 = vpop.xlane.xlu0 %498
        %500 = vadd.xlane.f32.xlu0 %v446
        %v501 = vpop.xlane.xlu0 %500
        %502 = vadd.xlane.f32.xlu0 %v447
        %v503 = vpop.xlane.xlu0 %502
        %504 = vadd.xlane.f32.xlu0 %v448
        %v505 = vpop.xlane.xlu0 %504
        %506 = vadd.xlane.f32.xlu0 %v449
        %v507 = vpop.xlane.xlu0 %506
        %508 = vadd.xlane.f32.xlu0 %v450
        %v509 = vpop.xlane.xlu0 %508
        %510 = vadd.xlane.f32.xlu0 %v451
        %v511 = vpop.xlane.xlu0 %510
        %512 = vadd.xlane.f32.xlu0 %v452
        %v513 = vpop.xlane.xlu0 %512
        %514 = vadd.xlane.f32.xlu0 %v453
        %v515 = vpop.xlane.xlu0 %514
        %516 = vadd.xlane.f32.xlu0 %v454
        %v517 = vpop.xlane.xlu0 %516
        %518 = vadd.xlane.f32.xlu0 %v455
        %v519 = vpop.xlane.xlu0 %518
        %v520 = vmul.f32 %v457, %v359
        %v521 = vmul.f32 %v459, %v359
        %v522 = vmul.f32 %v461, %v359
        %v523 = vmul.f32 %v463, %v359
        %v524 = vmul.f32 %v465, %v359
        %v525 = vmul.f32 %v467, %v359
        %v526 = vmul.f32 %v469, %v359
        %v527 = vmul.f32 %v471, %v359
        %v528 = vmul.f32 %v473, %v359
        %v529 = vmul.f32 %v475, %v359
        %v530 = vmul.f32 %v477, %v359
        %v531 = vmul.f32 %v479, %v359
        %v532 = vmul.f32 %v481, %v359
        %v533 = vmul.f32 %v483, %v359
        %v534 = vmul.f32 %v485, %v359
        %v535 = vmul.f32 %v487, %v359
        %v536 = vmul.f32 %v489, %v359
        %v537 = vmul.f32 %v491, %v359
        %v538 = vmul.f32 %v493, %v359
        %v539 = vmul.f32 %v495, %v359
        %v540 = vmul.f32 %v497, %v359
        %v541 = vmul.f32 %v499, %v359
        %v542 = vmul.f32 %v501, %v359
        %v543 = vmul.f32 %v503, %v359
        %v544 = vmul.f32 %v505, %v359
        %v545 = vmul.f32 %v507, %v359
        %v546 = vmul.f32 %v509, %v359
        %v547 = vmul.f32 %v511, %v359
        %v548 = vmul.f32 %v513, %v359
        %v549 = vmul.f32 %v515, %v359
        %v550 = vmul.f32 %v517, %v359
        %v551 = vmul.f32 %v519, %v359
        %v552 = vadd.f32 %v520, 1e-05
        %v553 = vadd.f32 %v521, 1e-05
        %v554 = vadd.f32 %v522, 1e-05
        %v555 = vadd.f32 %v523, 1e-05
        %v556 = vadd.f32 %v524, 1e-05
        %v557 = vadd.f32 %v525, 1e-05
        %v558 = vadd.f32 %v526, 1e-05
        %v559 = vadd.f32 %v527, 1e-05
        %v560 = vadd.f32 %v528, 1e-05
        %v561 = vadd.f32 %v529, 1e-05
        %v562 = vadd.f32 %v530, 1e-05
        %v563 = vadd.f32 %v531, 1e-05
        %v564 = vadd.f32 %v532, 1e-05
        %v565 = vadd.f32 %v533, 1e-05
        %v566 = vadd.f32 %v534, 1e-05
        %v567 = vadd.f32 %v535, 1e-05
        %v568 = vadd.f32 %v536, 1e-05
        %v569 = vadd.f32 %v537, 1e-05
        %v570 = vadd.f32 %v538, 1e-05
        %v571 = vadd.f32 %v539, 1e-05
        %v572 = vadd.f32 %v540, 1e-05
        %v573 = vadd.f32 %v541, 1e-05
        %v574 = vadd.f32 %v542, 1e-05
        %v575 = vadd.f32 %v543, 1e-05
        %v576 = vadd.f32 %v544, 1e-05
        %v577 = vadd.f32 %v545, 1e-05
        %v578 = vadd.f32 %v546, 1e-05
        %v579 = vadd.f32 %v547, 1e-05
        %v580 = vadd.f32 %v548, 1e-05
        %v581 = vadd.f32 %v549, 1e-05
        %v582 = vadd.f32 %v550, 1e-05
        %v583 = vadd.f32 %v551, 1e-05
        %v584 = vrsqrt.pop %v552
        %v585 = vrsqrt.pop %v553
        %v586 = vrsqrt.pop %v554
        %v587 = vrsqrt.pop %v555
        %v588 = vrsqrt.pop %v556
        %v589 = vrsqrt.pop %v557
        %v590 = vrsqrt.pop %v558
        %v591 = vrsqrt.pop %v559
        %v592 = vrsqrt.pop %v560
        %v593 = vrsqrt.pop %v561
        %v594 = vrsqrt.pop %v562
        %v595 = vrsqrt.pop %v563
        %v596 = vrsqrt.pop %v564
        %v597 = vrsqrt.pop %v565
        %v598 = vrsqrt.pop %v566
        %v599 = vrsqrt.pop %v567
        %v600 = vrsqrt.pop %v568
        %v601 = vrsqrt.pop %v569
        %v602 = vrsqrt.pop %v570
        %v603 = vrsqrt.pop %v571
        %v604 = vrsqrt.pop %v572
        %v605 = vrsqrt.pop %v573
        %v606 = vrsqrt.pop %v574
        %v607 = vrsqrt.pop %v575
        %v608 = vrsqrt.pop %v576
        %v609 = vrsqrt.pop %v577
        %v610 = vrsqrt.pop %v578
        %v611 = vrsqrt.pop %v579
        %v612 = vrsqrt.pop %v580
        %v613 = vrsqrt.pop %v581
        %v614 = vrsqrt.pop %v582
        %v615 = vrsqrt.pop %v583
        %v616 = vmul.f32 %v392, %v584
        %v617 = vmul.f32 %v393, %v585
        %v618 = vmul.f32 %v394, %v586
        %v619 = vmul.f32 %v395, %v587
        %v620 = vmul.f32 %v396, %v588
        %v621 = vmul.f32 %v397, %v589
        %v622 = vmul.f32 %v398, %v590
        %v623 = vmul.f32 %v399, %v591
        %v624 = vmul.f32 %v400, %v592
        %v625 = vmul.f32 %v401, %v593
        %v626 = vmul.f32 %v402, %v594
        %v627 = vmul.f32 %v403, %v595
        %v628 = vmul.f32 %v404, %v596
        %v629 = vmul.f32 %v405, %v597
        %v630 = vmul.f32 %v406, %v598
        %v631 = vmul.f32 %v407, %v599
        %v632 = vmul.f32 %v408, %v600
        %v633 = vmul.f32 %v409, %v601
        %v634 = vmul.f32 %v410, %v602
        %v635 = vmul.f32 %v411, %v603
        %v636 = vmul.f32 %v412, %v604
        %v637 = vmul.f32 %v413, %v605
        %v638 = vmul.f32 %v414, %v606
        %v639 = vmul.f32 %v415, %v607
        %v640 = vmul.f32 %v416, %v608
        %v641 = vmul.f32 %v417, %v609
        %v642 = vmul.f32 %v418, %v610
        %v643 = vmul.f32 %v419, %v611
        %v644 = vmul.f32 %v420, %v612
        %v645 = vmul.f32 %v421, %v613
        %v646 = vmul.f32 %v422, %v614
        %v647 = vmul.f32 %v423, %v615
        %v648 = vld [vmem:[%s2] sm:$0x1]
        %v650 = vlaneseq
        %v651 = vshrl.u32 %v650, 7
        %v652 = vsub.s32 0, %v651
        %v653 = vrot.slane %v648, %v652
        %v655 = vmul.f32 %v616, %v653
        %v656 = vmul.f32 %v617, %v653
        %v657 = vmul.f32 %v618, %v653
        %v658 = vmul.f32 %v619, %v653
        %v659 = vmul.f32 %v620, %v653
        %v660 = vmul.f32 %v621, %v653
        %v661 = vmul.f32 %v622, %v653
        %v662 = vmul.f32 %v623, %v653
        %v663 = vmul.f32 %v624, %v653
        %v664 = vmul.f32 %v625, %v653
        %v665 = vmul.f32 %v626, %v653
        %v666 = vmul.f32 %v627, %v653
        %v667 = vmul.f32 %v628, %v653
        %v668 = vmul.f32 %v629, %v653
        %v669 = vmul.f32 %v630, %v653
        %v670 = vmul.f32 %v631, %v653
        %v671 = vmul.f32 %v632, %v653
        %v672 = vmul.f32 %v633, %v653
        %v673 = vmul.f32 %v634, %v653
        %v674 = vmul.f32 %v635, %v653
        %v675 = vmul.f32 %v636, %v653
        %v676 = vmul.f32 %v637, %v653
        %v677 = vmul.f32 %v638, %v653
        %v678 = vmul.f32 %v639, %v653
        %v679 = vmul.f32 %v640, %v653
        %v680 = vmul.f32 %v641, %v653
        %v681 = vmul.f32 %v642, %v653
        %v682 = vmul.f32 %v643, %v653
        %v683 = vmul.f32 %v644, %v653
        %v684 = vmul.f32 %v645, %v653
        %v685 = vmul.f32 %v646, %v653
        %v686 = vmul.f32 %v647, %v653
        %v687 = vld [vmem:[%s3] sm:$0x1]
        %v689 = vlaneseq
        %v690 = vshrl.u32 %v689, 7
        %v691 = vsub.s32 0, %v690
        %v692 = vrot.slane %v687, %v691
        %v694 = vadd.f32 %v655, %v692
        %v695 = vadd.f32 %v656, %v692
        %v696 = vadd.f32 %v657, %v692
        %v697 = vadd.f32 %v658, %v692
        %v698 = vadd.f32 %v659, %v692
        %v699 = vadd.f32 %v660, %v692
        %v700 = vadd.f32 %v661, %v692
        %v701 = vadd.f32 %v662, %v692
        %v702 = vadd.f32 %v663, %v692
        %v703 = vadd.f32 %v664, %v692
        %v704 = vadd.f32 %v665, %v692
        %v705 = vadd.f32 %v666, %v692
        %v706 = vadd.f32 %v667, %v692
        %v707 = vadd.f32 %v668, %v692
        %v708 = vadd.f32 %v669, %v692
        %v709 = vadd.f32 %v670, %v692
        %v710 = vadd.f32 %v671, %v692
        %v711 = vadd.f32 %v672, %v692
        %v712 = vadd.f32 %v673, %v692
        %v713 = vadd.f32 %v674, %v692
        %v714 = vadd.f32 %v675, %v692
        %v715 = vadd.f32 %v676, %v692
        %v716 = vadd.f32 %v677, %v692
        %v717 = vadd.f32 %v678, %v692
        %v718 = vadd.f32 %v679, %v692
        %v719 = vadd.f32 %v680, %v692
        %v720 = vadd.f32 %v681, %v692
        %v721 = vadd.f32 %v682, %v692
        %v722 = vadd.f32 %v683, %v692
        %v723 = vadd.f32 %v684, %v692
        %v724 = vadd.f32 %v685, %v692
        %v725 = vadd.f32 %v686, %v692
        %v726 = vpack.c.bf16 %v695, %v694
        %v727 = vpack.c.bf16 %v697, %v696
        %v728 = vpack.c.bf16 %v699, %v698
        %v729 = vpack.c.bf16 %v701, %v700
        %v730 = vpack.c.bf16 %v703, %v702
        %v731 = vpack.c.bf16 %v705, %v704
        %v732 = vpack.c.bf16 %v707, %v706
        %v733 = vpack.c.bf16 %v709, %v708
        %v734 = vpack.c.bf16 %v711, %v710
        %v735 = vpack.c.bf16 %v713, %v712
        %v736 = vpack.c.bf16 %v715, %v714
        %v737 = vpack.c.bf16 %v717, %v716
        %v738 = vpack.c.bf16 %v719, %v718
        %v739 = vpack.c.bf16 %v721, %v720
        %v740 = vpack.c.bf16 %v723, %v722
        %v741 = vpack.c.bf16 %v725, %v724
        %v742 = vld [vmem:[#allocation7] sm:$0xf]
        %v743 = vld [vmem:[#allocation7 + $0x4] sm:$0xf]
        %v744 = vld [vmem:[#allocation7 + $0x8] sm:$0xf]
        %v745 = vld [vmem:[#allocation7 + $0xc] sm:$0xf]
        %v746 = vld [vmem:[#allocation7 + $0x10] sm:$0xf]
        %v747 = vld [vmem:[#allocation7 + $0x14] sm:$0xf]
        %v748 = vld [vmem:[#allocation7 + $0x18] sm:$0xf]
        %v749 = vld [vmem:[#allocation7 + $0x1c] sm:$0xf]
        %v750 = vld [vmem:[#allocation7 + $0x20] sm:$0xf]
        %v751 = vld [vmem:[#allocation7 + $0x24] sm:$0xf]
        %v752 = vld [vmem:[#allocation7 + $0x28] sm:$0xf]
        %v753 = vld [vmem:[#allocation7 + $0x2c] sm:$0xf]
        %v754 = vld [vmem:[#allocation7 + $0x30] sm:$0xf]
        %v755 = vld [vmem:[#allocation7 + $0x34] sm:$0xf]
        %v756 = vld [vmem:[#allocation7 + $0x38] sm:$0xf]
        %v757 = vld [vmem:[#allocation7 + $0x3c] sm:$0xf]
        %v758 = vld [vmem:[%s5] sm:$0x1]
        %v760 = vlaneseq
        %v761 = vshrl.u32 %v760, 7
        %v762 = vsub.s32 0, %v761
        %v763 = vrot.slane %v758, %v762
        %v781 = vunpack.c.l.b16 %v742
        %v782 = vunpack.c.l.b16 %v743
        %v783 = vunpack.c.l.b16 %v744
        %v784 = vunpack.c.l.b16 %v745
        %v785 = vunpack.c.l.b16 %v746
        %v786 = vunpack.c.l.b16 %v747
        %v787 = vunpack.c.l.b16 %v748
        %v788 = vunpack.c.l.b16 %v749
        %v789 = vunpack.c.l.b16 %v750
        %v790 = vunpack.c.l.b16 %v751
        %v791 = vunpack.c.l.b16 %v752
        %v792 = vunpack.c.l.b16 %v753
        %v793 = vunpack.c.l.b16 %v754
        %v794 = vunpack.c.l.b16 %v755
        %v795 = vunpack.c.l.b16 %v756
        %v796 = vunpack.c.l.b16 %v757
        %v797 = vpack.c.b16 %v782, %v781
        %v798 = vpack.c.b16 %v784, %v783
        %v799 = vpack.c.b16 %v786, %v785
        %v800 = vpack.c.b16 %v788, %v787
        %v801 = vpack.c.b16 %v790, %v789
        %v802 = vpack.c.b16 %v792, %v791
        %v803 = vpack.c.b16 %v794, %v793
        %v804 = vpack.c.b16 %v796, %v795
        %813 = vmatprep.subr.bf16.mxu0 0
        %814 = vmatpush1.bf16.msra.mxu0 %v804
        %815 = vmatprep.subr.bf16.mxu0 0
        %816 = vmatpush1.bf16.msra.mxu0 %v803
        %817 = vmatprep.subr.bf16.mxu0 0
        %818 = vmatpush1.bf16.msra.mxu0 %v802
        %819 = vmatprep.subr.bf16.mxu0 0
        %820 = vmatpush1.bf16.msra.mxu0 %v801
        %821 = vmatprep.subr.bf16.mxu0 0
        %822 = vmatpush1.bf16.msra.mxu0 %v800
        %823 = vmatprep.subr.bf16.mxu0 0
        %824 = vmatpush1.bf16.msra.mxu0 %v799
        %825 = vmatprep.subr.bf16.mxu0 0
        %826 = vmatpush1.bf16.msra.mxu0 %v798
        %827 = vmatprep.subr.bf16.mxu0 0
        %828 = vmatpush1.bf16.msra.mxu0 %v797
        %829 = vmatprep.subr.bf16.mxu0 0
        %830 = vmatpush2.bf16.msra.mxu0 0
        %831 = vmatprep.subr.bf16.mxu0 0
        %832 = vmatpush2.bf16.msra.mxu0 0
        %833 = vmatprep.subr.bf16.mxu0 0
        %834 = vmatpush2.bf16.msra.mxu0 0
        %835 = vmatprep.subr.bf16.mxu0 0
        %836 = vmatpush2.bf16.msra.mxu0 0
        %837 = vmatprep.subr.bf16.mxu0 0
        %838 = vmatpush2.bf16.msra.mxu0 0
        %839 = vmatprep.subr.bf16.mxu0 0
        %840 = vmatpush2.bf16.msra.mxu0 0
        %841 = vmatprep.subr.bf16.mxu0 0
        %842 = vmatpush2.bf16.msra.mxu0 0
        %843 = vmatprep.subr.bf16.mxu0 0
        %844 = vmatpush2.bf16.msra.mxu0 0
        %845 = vmatprep.mubr.bf16.mxu0 0
        %846 = vmatmul.mubr.bf16.gmra.mxu0 %v726
        %v847 = vpop.f32.mrf.mxu0
        %v848 = vadd.f32 %v763, %v847
        %v849 = vpop.f32.mrf.mxu0
        %v850 = vpop.f32.mrf.mxu0
        %v851 = vadd.f32 %v763, %v850
        %v852 = vpop.f32.mrf.mxu0
        %853 = vmatprep.mubr.bf16.mxu0 0
        %854 = vmatmul.mubr.bf16.gmra.mxu0 %v727
        %v855 = vpop.f32.mrf.mxu0
        %v856 = vadd.f32 %v763, %v855
        %v857 = vpop.f32.mrf.mxu0
        %v858 = vpop.f32.mrf.mxu0
        %v859 = vadd.f32 %v763, %v858
        %v860 = vpop.f32.mrf.mxu0
        %861 = vmatprep.mubr.bf16.mxu0 0
        %862 = vmatmul.mubr.bf16.gmra.mxu0 %v728
        %v863 = vpop.f32.mrf.mxu0
        %v864 = vadd.f32 %v763, %v863
        %v865 = vpop.f32.mrf.mxu0
        %v866 = vpop.f32.mrf.mxu0
        %v867 = vadd.f32 %v763, %v866
        %v868 = vpop.f32.mrf.mxu0
        %869 = vmatprep.mubr.bf16.mxu0 0
        %870 = vmatmul.mubr.bf16.gmra.mxu0 %v729
        %v871 = vpop.f32.mrf.mxu0
        %v872 = vadd.f32 %v763, %v871
        %v873 = vpop.f32.mrf.mxu0
        %v874 = vpop.f32.mrf.mxu0
        %v875 = vadd.f32 %v763, %v874
        %v876 = vpop.f32.mrf.mxu0
        %877 = vmatprep.mubr.bf16.mxu0 0
        %878 = vmatmul.mubr.bf16.gmra.mxu0 %v730
        %v879 = vpop.f32.mrf.mxu0
        %v880 = vadd.f32 %v763, %v879
        %v881 = vpop.f32.mrf.mxu0
        %v882 = vpop.f32.mrf.mxu0
        %v883 = vadd.f32 %v763, %v882
        %v884 = vpop.f32.mrf.mxu0
        %885 = vmatprep.mubr.bf16.mxu0 0
        %886 = vmatmul.mubr.bf16.gmra.mxu0 %v731
        %v887 = vpop.f32.mrf.mxu0
        %v888 = vadd.f32 %v763, %v887
        %v889 = vpop.f32.mrf.mxu0
        %v890 = vpop.f32.mrf.mxu0
        %v891 = vadd.f32 %v763, %v890
        %v892 = vpop.f32.mrf.mxu0
        %893 = vmatprep.mubr.bf16.mxu0 0
        %894 = vmatmul.mubr.bf16.gmra.mxu0 %v732
        %v895 = vpop.f32.mrf.mxu0
        %v896 = vadd.f32 %v763, %v895
        %v897 = vpop.f32.mrf.mxu0
        %v898 = vpop.f32.mrf.mxu0
        %v899 = vadd.f32 %v763, %v898
        %v900 = vpop.f32.mrf.mxu0
        %901 = vmatprep.mubr.bf16.mxu0 0
        %902 = vmatmul.mubr.bf16.gmra.mxu0 %v733
        %v903 = vpop.f32.mrf.mxu0
        %v904 = vadd.f32 %v763, %v903
        %v905 = vpop.f32.mrf.mxu0
        %v906 = vpop.f32.mrf.mxu0
        %v907 = vadd.f32 %v763, %v906
        %v908 = vpop.f32.mrf.mxu0
        %909 = vmatprep.mubr.bf16.mxu0 0
        %910 = vmatmul.mubr.bf16.gmra.mxu0 %v734
        %v911 = vpop.f32.mrf.mxu0
        %v912 = vadd.f32 %v763, %v911
        %v913 = vpop.f32.mrf.mxu0
        %v914 = vpop.f32.mrf.mxu0
        %v915 = vadd.f32 %v763, %v914
        %v916 = vpop.f32.mrf.mxu0
        %917 = vmatprep.mubr.bf16.mxu0 0
        %918 = vmatmul.mubr.bf16.gmra.mxu0 %v735
        %v919 = vpop.f32.mrf.mxu0
        %v920 = vadd.f32 %v763, %v919
        %v921 = vpop.f32.mrf.mxu0
        %v922 = vpop.f32.mrf.mxu0
        %v923 = vadd.f32 %v763, %v922
        %v924 = vpop.f32.mrf.mxu0
        %925 = vmatprep.mubr.bf16.mxu0 0
        %926 = vmatmul.mubr.bf16.gmra.mxu0 %v736
        %v927 = vpop.f32.mrf.mxu0
        %v928 = vadd.f32 %v763, %v927
        %v929 = vpop.f32.mrf.mxu0
        %v930 = vpop.f32.mrf.mxu0
        %v931 = vadd.f32 %v763, %v930
        %v932 = vpop.f32.mrf.mxu0
        %933 = vmatprep.mubr.bf16.mxu0 0
        %934 = vmatmul.mubr.bf16.gmra.mxu0 %v737
        %v935 = vpop.f32.mrf.mxu0
        %v936 = vadd.f32 %v763, %v935
        %v937 = vpop.f32.mrf.mxu0
        %v938 = vpop.f32.mrf.mxu0
        %v939 = vadd.f32 %v763, %v938
        %v940 = vpop.f32.mrf.mxu0
        %941 = vmatprep.mubr.bf16.mxu0 0
        %942 = vmatmul.mubr.bf16.gmra.mxu0 %v738
        %v943 = vpop.f32.mrf.mxu0
        %v944 = vadd.f32 %v763, %v943
        %v945 = vpop.f32.mrf.mxu0
        %v946 = vpop.f32.mrf.mxu0
        %v947 = vadd.f32 %v763, %v946
        %v948 = vpop.f32.mrf.mxu0
        %949 = vmatprep.mubr.bf16.mxu0 0
        %950 = vmatmul.mubr.bf16.gmra.mxu0 %v739
        %v951 = vpop.f32.mrf.mxu0
        %v952 = vadd.f32 %v763, %v951
        %v953 = vpop.f32.mrf.mxu0
        %v954 = vpop.f32.mrf.mxu0
        %v955 = vadd.f32 %v763, %v954
        %v956 = vpop.f32.mrf.mxu0
        %957 = vmatprep.mubr.bf16.mxu0 0
        %958 = vmatmul.mubr.bf16.gmra.mxu0 %v740
        %v959 = vpop.f32.mrf.mxu0
        %v960 = vadd.f32 %v763, %v959
        %v961 = vpop.f32.mrf.mxu0
        %v962 = vpop.f32.mrf.mxu0
        %v963 = vadd.f32 %v763, %v962
        %v964 = vpop.f32.mrf.mxu0
        %965 = vmatprep.mubr.bf16.mxu0 0
        %966 = vmatmul.mubr.bf16.gmra.mxu0 %v741
        %v967 = vpop.f32.mrf.mxu0
        %v968 = vadd.f32 %v763, %v967
        %v969 = vpop.f32.mrf.mxu0
        %v970 = vpop.f32.mrf.mxu0
        %v971 = vadd.f32 %v763, %v970
        %v972 = vpop.f32.mrf.mxu0
        %973 = vdwg.mxu0
        %v974 = vadd.f32 %v263, %v848
        %v975 = vadd.f32 %v264, %v851
        %v976 = vadd.f32 %v265, %v856
        %v977 = vadd.f32 %v266, %v859
        %v978 = vadd.f32 %v267, %v864
        %v979 = vadd.f32 %v268, %v867
        %v980 = vadd.f32 %v269, %v872
        %v981 = vadd.f32 %v270, %v875
        %v982 = vadd.f32 %v271, %v880
        %v983 = vadd.f32 %v272, %v883
        %v984 = vadd.f32 %v273, %v888
        %v985 = vadd.f32 %v274, %v891
        %v986 = vadd.f32 %v275, %v896
        %v987 = vadd.f32 %v276, %v899
        %v988 = vadd.f32 %v277, %v904
        %v989 = vadd.f32 %v278, %v907
        %v990 = vadd.f32 %v279, %v912
        %v991 = vadd.f32 %v280, %v915
        %v992 = vadd.f32 %v281, %v920
        %v993 = vadd.f32 %v282, %v923
        %v994 = vadd.f32 %v283, %v928
        %v995 = vadd.f32 %v284, %v931
        %v996 = vadd.f32 %v285, %v936
        %v997 = vadd.f32 %v286, %v939
        %v998 = vadd.f32 %v287, %v944
        %v999 = vadd.f32 %v288, %v947
        %v1000 = vadd.f32 %v289, %v952
        %v1001 = vadd.f32 %v290, %v955
        %v1002 = vadd.f32 %v291, %v960
        %v1003 = vadd.f32 %v292, %v963
        %v1004 = vadd.f32 %v293, %v968
        %v1005 = vadd.f32 %v294, %v971
        %1006 = vst [vmem:[%s259] sm:$0xff] %v974
        %1007 = vst [vmem:[%s259 + $0x8] sm:$0xff] %v975
        %1008 = vst [vmem:[%s259 + $0x10] sm:$0xff] %v976
        %1009 = vst [vmem:[%s259 + $0x18] sm:$0xff] %v977
        %1010 = vst [vmem:[%s259 + $0x20] sm:$0xff] %v978
        %1011 = vst [vmem:[%s259 + $0x28] sm:$0xff] %v979
        %1012 = vst [vmem:[%s259 + $0x30] sm:$0xff] %v980
        %1013 = vst [vmem:[%s259 + $0x38] sm:$0xff] %v981
        %1014 = vst [vmem:[%s259 + $0x40] sm:$0xff] %v982
        %1015 = vst [vmem:[%s259 + $0x48] sm:$0xff] %v983
        %1016 = vst [vmem:[%s259 + $0x50] sm:$0xff] %v984
        %1017 = vst [vmem:[%s259 + $0x58] sm:$0xff] %v985
        %1018 = vst [vmem:[%s259 + $0x60] sm:$0xff] %v986
        %1019 = vst [vmem:[%s259 + $0x68] sm:$0xff] %v987
        %1020 = vst [vmem:[%s259 + $0x70] sm:$0xff] %v988
        %1021 = vst [vmem:[%s259 + $0x78] sm:$0xff] %v989
        %1022 = vst [vmem:[%s259 + $0x80] sm:$0xff] %v990
        %1023 = vst [vmem:[%s259 + $0x88] sm:$0xff] %v991
        %1024 = vst [vmem:[%s259 + $0x90] sm:$0xff] %v992
        %1025 = vst [vmem:[%s259 + $0x98] sm:$0xff] %v993
        %1026 = vst [vmem:[%s259 + $0xa0] sm:$0xff] %v994
        %1027 = vst [vmem:[%s259 + $0xa8] sm:$0xff] %v995
        %1028 = vst [vmem:[%s259 + $0xb0] sm:$0xff] %v996
        %1029 = vst [vmem:[%s259 + $0xb8] sm:$0xff] %v997
        %1030 = vst [vmem:[%s259 + $0xc0] sm:$0xff] %v998
        %1031 = vst [vmem:[%s259 + $0xc8] sm:$0xff] %v999
        %1032 = vst [vmem:[%s259 + $0xd0] sm:$0xff] %v1000
        %1033 = vst [vmem:[%s259 + $0xd8] sm:$0xff] %v1001
        %1034 = vst [vmem:[%s259 + $0xe0] sm:$0xff] %v1002
        %1035 = vst [vmem:[%s259 + $0xe8] sm:$0xff] %v1003
        %1036 = vst [vmem:[%s259 + $0xf0] sm:$0xff] %v1004
        %1037 = vst [vmem:[%s259 + $0xf8] sm:$0xff] %v1005
        %s1038 = sand.u32 %s143, 1
        %s1039 = scalar_lea.sflag [#allocation6], %s1038
        %s1040 = sand.u32 %s143, 1
        %s1041 = smul.addr %s1040, 256
        %s1042 = scalar_lea.vmem [#allocation9], %s1041
        // Predicated region
        $region49: #{tpu_custom_call.1} parent=39 // pred_check
          %p1043 = pneg %p153
        $region50: #{tpu_custom_call.1} parent=39 // pred_check_branch
          %1045 = sbr.rel (%p1043) target = $region52
        $region51: #{tpu_custom_call.1} parent=39 // pred_region
          %s1046 = smul.u32 32, %s25
          %s1048 = ssub.s32 4096, 4096
          %1049 = vsyncadd %s1039, %s1048
          %s1050 = smul.addr %s1046, 128
          %s1051 = scalar_lea.hbm %s6, %s1050
          %s1052 = sshll.u32 %s1042, 4
          %s1053 = int_to_ptr.vmem [resolvable:$true] %s1052
          %1058 = dma.vmem_to_hbm [thread:$0]  %s1053, 4096, %s1051, %s1039, 128, 128, 8
        $region52: #{tpu_custom_call.1} parent=39 // pred_fallthru
          _
      $region40: #{tpu_custom_call.1} parent=5 // pred_fallthru
        _
      %p1059 = scmp.le.s32.totalorder 2, %s20
      // Predicated region
      $region53: #{tpu_custom_call.1} parent=5 // pred_check
        %p1060 = pneg %p1059
      $region54: #{tpu_custom_call.1} parent=5 // pred_check_branch
        %1062 = sbr.rel (%p1060) target = $region56
      $region55: #{tpu_custom_call.1} parent=5 // pred_region
        %s1063 = ssub.s32 %s20, 2
        // Predicated region
        $region57: #{tpu_custom_call.1} parent=55 // pred_check
          %p1064 = pneg %p159
        $region58: #{tpu_custom_call.1} parent=55 // pred_check_branch
          %1066 = sbr.rel (%p1064) target = $region60
        $region59: #{tpu_custom_call.1} parent=55 // pred_region
          %s1067 = sand.u32 %s144, 1
          %s1068 = scalar_lea.sflag [#allocation6], %s1067
          %s1069 = sand.u32 %s144, 1
          %s1070 = smul.addr %s1069, 256
          %s1071 = scalar_lea.vmem [#allocation9], %s1070
          %1072 = dma.done %s1068, 4096
        $region60: #{tpu_custom_call.1} parent=55 // pred_fallthru
          _
      $region56: #{tpu_custom_call.1} parent=5 // pred_fallthru
        _
    $region6: #{tpu_custom_call.1} parent=1 // loop_footer
      %s24 = sadd.s32 1, %s20
    $region7: #{tpu_custom_call.1} parent=1 // loop_footer_branch
      %19 = sbr.rel target = $region3
    $region8: #{tpu_custom_call.1} parent=1 // loop_exit
      _
    %1073 = vsyncpa [#allocation5], 1
    %s1074 = scalar_lea.sflag [#allocation5], 1
    %1075 = vsyncpa %s1074, 1
    %1076 = vsyncpa [#allocation8], 1
    %1077 = vsyncpa [#allocation6], 1
    %s1078 = scalar_lea.sflag [#allocation6], 1
    %1079 = vsyncpa %s1078, 1

</llo_original>
